<compile_context>
chip_gen: v6e
topology: v6e:2x2x1
jax: 0.10.0
libtpu: 0.0.40
codegen_flags: <defaults>
</compile_context>

<pallas_src>
import functools

import jax
import jax.numpy as jnp
from jax import lax
from jax.experimental import pallas as pl
from jax.experimental.pallas import tpu as pltpu


def _round_up(x, m):
    return ((x + m - 1) // m) * m


def _cdiv(a, b):
    return (a + b - 1) // b


def _supcon_kernel(*refs, temperature, base_temperature, n_contrast,
                   need_col_mask, use_labels):
    if use_labels:
        (rlab_ref, clab_ref, a_ref, c_ref, loss_ref,
         m_scr, l_scr, s_scr, cnt_scr) = refs
    else:
        (mask_ref, a_ref, c_ref, loss_ref,
         m_scr, l_scr, s_scr, cnt_scr) = refs

    i = pl.program_id(0)          # anchor-row block (parallel)
    j = pl.program_id(1)          # contrast-column block (reduction, last)
    tm = a_ref.shape[0]
    tn = c_ref.shape[0]

    NEG = jnp.float32(-1e30)

    @pl.when(j == 0)
    def _init():
        m_scr[...] = jnp.full_like(m_scr, NEG)
        l_scr[...] = jnp.zeros_like(l_scr)
        s_scr[...] = jnp.zeros_like(s_scr)
        cnt_scr[...] = jnp.zeros_like(cnt_scr)

    # anchor @ contrast.T: contract dim 1 of both operands (feature dim already
    # on the lane axis for both tiles), f32 accumulation on the MXU.
    # 1/temperature was folded into the anchor tile in the wrapper.
    adc = lax.dot_general(a_ref[...], c_ref[...], (((1,), (1,)), ((), ())),
                          preferred_element_type=jnp.float32)        # (TM, TN)

    # Logits mask: self-contrast (diagonal) exclusion (+ padded columns, only
    # when padding exists).  Built from thin iotas; broadcast does the rest.
    row_g = i * tm + lax.broadcasted_iota(jnp.int32, (tm, 1), 0)     # (TM, 1)
    col_g = j * tn + lax.broadcasted_iota(jnp.int32, (1, tn), 1)     # (1, TN)
    lm = row_g != col_g                                              # (TM, TN) bool
    if need_col_mask:
        lm = lm & (col_g < n_contrast)

    # Online (flash-style) masked log-sum-exp.
    adc_m = jnp.where(lm, adc, NEG)
    m_prev = m_scr[...]
    m_new = jnp.maximum(m_prev, jnp.max(adc_m, axis=1, keepdims=True))
    alpha = jnp.exp(m_prev - m_new)
    p = jnp.exp(adc_m - m_new)                   # masked entries underflow to 0
    l_scr[...] = alpha * l_scr[...] + jnp.sum(p, axis=1, keepdims=True)
    m_scr[...] = m_new

    # Positive-pair statistics (shift-free; the row-max cancels analytically).
    if use_labels:
        pos = (rlab_ref[...] == clab_ref[...]) & lm                  # bool
        s_scr[...] += jnp.sum(jnp.where(pos, adc, 0.0), axis=1, keepdims=True)
        cnt_scr[...] += jnp.sum(pos.astype(jnp.float32), axis=1, keepdims=True)
    else:
        pm = jnp.where(lm, mask_ref[...], 0.0)
        s_scr[...] += jnp.sum(pm * adc, axis=1, keepdims=True)
        cnt_scr[...] += jnp.sum(pm, axis=1, keepdims=True)

    @pl.when(j == pl.num_programs(1) - 1)
    def _finalize():
        cnt = cnt_scr[...]
        cnt_c = jnp.where(cnt < 1e-6, 1.0, cnt)
        lse = m_scr[...] + jnp.log(l_scr[...])
        mean_log_prob_pos = (s_scr[...] - cnt * lse) * pl.reciprocal(cnt_c)
        loss_ref[...] = (jnp.float32(-(temperature / base_temperature))
                         * mean_log_prob_pos)


def supcon_loss(features, labels=None, mask=None, *, temperature=0.07,
                contrast_mode='all', base_temperature=0.07,
                tm=512, tn=512, matmul_dtype=None, contrast_buffers=2):
    """Pallas implementation of SupConLoss.forward.

    features: [bsz, n_views, ...] (extra dims flattened into the feature dim)
    labels:   optional [bsz] int labels
    mask:     optional [bsz, bsz] float mask (possibly asymmetric)
    matmul_dtype: optional MXU contraction/storage dtype (jnp.bfloat16
                  recommended on v6e/v7x; fp8 dtypes also accepted on v7x);
                  softmax math always runs in f32.
    contrast_buffers: pipeline depth for the streamed contrast tile (>2 adds
                  pl.Buffered(n) to hide DMA jitter; costs one extra TN*D tile).
    """
    features = jnp.asarray(features)
    if features.ndim < 3:
        raise ValueError('`features` needs to be [bsz, n_views, ...]')
    if features.ndim > 3:
        features = features.reshape(features.shape[0], features.shape[1], -1)
    bsz, n_views, dim = features.shape

    if labels is not None and mask is not None:
        raise ValueError('Cannot define both `labels` and `mask`')
    use_labels = mask is None
    if labels is None and mask is None:
        labels = jnp.arange(bsz, dtype=jnp.int32)       # SimCLR: eye(bsz) mask
    if use_labels:
        labels = jnp.asarray(labels).reshape(-1).astype(jnp.int32)
        if labels.shape[0] != bsz:
            raise ValueError('Num of labels does not match num of features')
    else:
        mask = jnp.asarray(mask).astype(jnp.float32)

    # torch.cat(torch.unbind(features, dim=1), dim=0): view-major flatten.
    contrast_feature = jnp.transpose(features, (1, 0, 2)).reshape(n_views * bsz, dim)
    if contrast_mode == 'one':
        anchor_feature = features[:, 0]
        anchor_count = 1
    elif contrast_mode == 'all':
        anchor_feature = contrast_feature
        anchor_count = n_views
    else:
        raise ValueError('Unknown mode: {}'.format(contrast_mode))

    n_anchor = anchor_count * bsz
    n_contrast = n_views * bsz

    # Tile sizes: TM multiple of 8, TN multiple of 128, clamped to the padded
    # problem size.  TM is additionally clamped so the (parallel) anchor axis
    # has >= 2 blocks whenever possible (keeps both v7x TensorCores busy).
    tm = max(8, _round_up(int(tm), 8))
    tn = max(128, _round_up(int(tn), 128))
    tm_eff = min(tm, _round_up(_cdiv(n_anchor, 2), 8))
    tn_eff = min(tn, _round_up(n_contrast, 128))
    n_a_pad = _round_up(n_anchor, tm_eff)
    n_c_pad = _round_up(n_contrast, tn_eff)
    d_pad = _round_up(dim, 128)        # lane-dense feature loads / MXU depth

    contract_dtype = (jnp.dtype(matmul_dtype) if matmul_dtype is not None
                      else features.dtype)

    # Fold 1/temperature into the anchors (in f32, before the storage cast) and
    # do the storage-dtype cast once in the wrapper -- no per-step rescale/cast.
    inv_temp = jnp.float32(1.0 / temperature)
    anchor_scaled = anchor_feature.astype(jnp.float32) * inv_temp
    anchor_p = jnp.pad(anchor_scaled,
                       ((0, n_a_pad - n_anchor), (0, d_pad - dim))
                       ).astype(contract_dtype)
    contrast_p = jnp.pad(contrast_feature,
                         ((0, n_c_pad - n_contrast), (0, d_pad - dim))
                         ).astype(contract_dtype)

    need_col_mask = (n_c_pad != n_contrast)

    kernel = functools.partial(
        _supcon_kernel,
        temperature=float(temperature),
        base_temperature=float(base_temperature),
        n_contrast=int(n_contrast),
        need_col_mask=need_col_mask,
        use_labels=use_labels,
    )

    # Streamed contrast tile; optional deeper pipelining.
    if int(contrast_buffers) > 2:
        contrast_spec = pl.BlockSpec((tn_eff, d_pad), lambda i, j: (j, 0),
                                     pipeline_mode=pl.Buffered(int(contrast_buffers)))
    else:
        contrast_spec = pl.BlockSpec((tn_eff, d_pad), lambda i, j: (j, 0))
    feat_specs = [
        pl.BlockSpec((tm_eff, d_pad), lambda i, j: (i, 0)),   # anchor (resident over j)
        contrast_spec,
    ]

    mask_stream_bytes = 0
    if use_labels:
        row_labels = jnp.tile(labels, anchor_count).reshape(-1, 1)    # (n_anchor, 1)
        col_labels = jnp.tile(labels, n_views).reshape(1, -1)         # (1, n_contrast)
        row_labels = jnp.pad(row_labels, ((0, n_a_pad - n_anchor), (0, 0)),
                             constant_values=-2)
        col_labels = jnp.pad(col_labels, ((0, 0), (0, n_c_pad - n_contrast)),
                             constant_values=-1)
        inputs = (row_labels, col_labels, anchor_p, contrast_p)
        in_specs = [
            pl.BlockSpec((tm_eff, 1), lambda i, j: (i, 0)),
            pl.BlockSpec((1, tn_eff), lambda i, j: (0, j)),
        ] + feat_specs
    else:
        mask_stream_bytes = 2 * tm_eff * tn_eff * 4
        if bsz % tm_eff == 0 and bsz % tn_eff == 0:
            # Tiles divide bsz -> wrap the ORIGINAL bsz x bsz mask with a
            # modular index_map (no N x N tiled mask materialized in HBM).
            rb = bsz // tm_eff
            cb = bsz // tn_eff
            mask_in = mask
            mask_spec = pl.BlockSpec((tm_eff, tn_eff),
                                     lambda i, j: (i % rb, j % cb))
        else:
            mask_in = jnp.tile(mask, (anchor_count, n_views))
            mask_in = jnp.pad(mask_in, ((0, n_a_pad - n_anchor),
                                        (0, n_c_pad - n_contrast)))
            mask_spec = pl.BlockSpec((tm_eff, tn_eff), lambda i, j: (i, j))
        inputs = (mask_in, anchor_p, contrast_p)
        in_specs = [mask_spec] + feat_specs

    # VMEM budget: tiles (double/deep-buffered) + label/mask streams + scratch +
    # output + in-kernel (TM,TN) temporaries + headroom.  Stays within the v7x
    # 32 MiB default scoped limit for the default tile sizes.
    cbytes = jnp.dtype(contract_dtype).itemsize
    nbuf_c = max(2, int(contrast_buffers))
    vmem_est = (2 * tm_eff * d_pad * cbytes
                + nbuf_c * tn_eff * d_pad * cbytes
                + mask_stream_bytes
                + 2 * (tm_eff * 128 + 8 * tn_eff) * 4
                + 6 * tm_eff * 128 * 4
                + 8 * tm_eff * tn_eff * 4
                + (2 << 20))
    vmem_limit = int(min(max(vmem_est, 16 << 20), 100 << 20))

    loss_rows = pl.pallas_call(
        kernel,
        out_shape=jax.ShapeDtypeStruct((n_a_pad, 1), jnp.float32),
        grid=(n_a_pad // tm_eff, n_c_pad // tn_eff),
        in_specs=in_specs,
        out_specs=pl.BlockSpec((tm_eff, 1), lambda i, j: (i, 0)),
        scratch_shapes=[pltpu.VMEM((tm_eff, 1), jnp.float32)] * 4,  # m, l, s, count
        compiler_params=pltpu.CompilerParams(
            dimension_semantics=("parallel", "arbitrary"),
            vmem_limit_bytes=vmem_limit),
    )(*inputs)

    # loss.view(anchor_count, batch_size).mean() == mean over all anchor rows.
    return jnp.mean(loss_rows[:n_anchor, 0])


def _supcon_loss_ref(features, labels=None, mask=None, *, temperature=0.07,
                     contrast_mode='all', base_temperature=0.07):
    """Pure-JAX reference mirroring the torch module (for sanity checking)."""
    bsz, n_views = features.shape[0], features.shape[1]
    feats = features.reshape(bsz, n_views, -1).astype(jnp.float32)
    if labels is None and mask is None:
        mask = jnp.eye(bsz, dtype=jnp.float32)
    elif labels is not None:
        labels = labels.reshape(-1, 1)
        mask = (labels == labels.T).astype(jnp.float32)
    else:
        mask = mask.astype(jnp.float32)
    cf = jnp.transpose(feats, (1, 0, 2)).reshape(n_views * bsz, -1)
    if contrast_mode == 'one':
        af = feats[:, 0]
        anchor_count = 1
    else:
        af = cf
        anchor_count = n_views
    adc = jnp.dot(af, cf.T) / temperature
    logits = adc - jnp.max(adc, axis=1, keepdims=True)
    mask_t = jnp.tile(mask, (anchor_count, n_views))
    n_a = anchor_count * bsz
    lm = jnp.ones_like(mask_t).at[jnp.arange(n_a), jnp.arange(n_a)].set(0.0)
    mask_t = mask_t * lm
    exp_logits = jnp.exp(logits) * lm
    log_prob = logits - jnp.log(exp_logits.sum(1, keepdims=True))
    mpp = mask_t.sum(1)
    mpp = jnp.where(mpp < 1e-6, 1.0, mpp)
    mlpp = (mask_t * log_prob).sum(1) / mpp
    loss = -(temperature / base_temperature) * mlpp
    return loss.mean()


if __name__ == "__main__":
    key = jax.random.PRNGKey(0)
    k_feat, k_lab, k_mask = jax.random.split(key, 3)

    bsz, n_views, dim = 8, 2, 32
    features = jax.random.normal(k_feat, (bsz, n_views, dim), dtype=jnp.float32)
    features = features / jnp.linalg.norm(features, axis=-1, keepdims=True)
    labels = jax.random.randint(k_lab, (bsz,), 0, 4)

    # 1) supervised, contrast_mode='all' (labels fast path)
    loss = jax.block_until_ready(supcon_loss(features, labels=labels))
    ref = _supcon_loss_ref(features, labels=labels)
    assert jnp.allclose(loss, ref, atol=1e-4, rtol=1e-4), ("all/labels", loss, ref)

    # 2) unsupervised SimCLR case (no labels, no mask)
    loss_u = jax.block_until_ready(supcon_loss(features))
    ref_u = _supcon_loss_ref(features)
    assert jnp.allclose(loss_u, ref_u, atol=1e-4, rtol=1e-4), ("simclr", loss_u, ref_u)

    # 3) explicit (asymmetric) bsz x bsz mask
    mask = (jax.random.uniform(k_mask, (bsz, bsz)) > 0.5).astype(jnp.float32)
    loss_m = jax.block_until_ready(supcon_loss(features, mask=mask))
    ref_m = _supcon_loss_ref(features, mask=mask)
    assert jnp.allclose(loss_m, ref_m, atol=1e-4, rtol=1e-4), ("mask", loss_m, ref_m)

    # 4) contrast_mode='one'
    loss_o = jax.block_until_ready(
        supcon_loss(features, labels=labels, contrast_mode='one'))
    ref_o = _supcon_loss_ref(features, labels=labels, contrast_mode='one')
    assert jnp.allclose(loss_o, ref_o, atol=1e-4, rtol=1e-4), ("one", loss_o, ref_o)

    # 5) bf16 MXU storage (f32 accumulation) -- throughput option, loose tolerance
    loss_bf = jax.block_until_ready(
        supcon_loss(features, labels=labels, matmul_dtype=jnp.bfloat16))
    assert bool(jnp.isfinite(loss_bf)) and abs(float(loss_bf) - float(ref)) < 0.2, \
        ("bf16", loss_bf, ref)

    print("KERNEL_OK")
</pallas_src>

<mosaic_0001>
module attributes {stable_mosaic.version = 11 : i64} {
  func.func @_supcon_kernel(%arg0: i32, %arg1: i32, %arg2: memref<8x1xi32, #tpu.memory_space<vmem>>, %arg3: memref<1x128xi32, #tpu.memory_space<vmem>>, %arg4: memref<8x128xf32, #tpu.memory_space<vmem>>, %arg5: memref<128x128xf32, #tpu.memory_space<vmem>>, %arg6: memref<8x1xf32, #tpu.memory_space<vmem>>, %arg7: memref<8x1xf32, #tpu.memory_space<vmem>>, %arg8: memref<8x1xf32, #tpu.memory_space<vmem>>, %arg9: memref<8x1xf32, #tpu.memory_space<vmem>>, %arg10: memref<8x1xf32, #tpu.memory_space<vmem>>) attributes {dimension_semantics = [#tpu.dimension_semantics<parallel>, #tpu.dimension_semantics<arbitrary>], iteration_bounds = array<i64: 2, 1>, scalar_prefetch = 0 : i64, scratch_operands = 4 : i64, tpu.core_type = #tpu.core_type<tc>, window_params = [{transform_indices = @transform_0, window_bounds = array<i64: 8, 1>}, {transform_indices = @transform_1, window_bounds = array<i64: 1, 128>}, {transform_indices = @transform_2, window_bounds = array<i64: 8, 128>}, {transform_indices = @transform_3, window_bounds = array<i64: 128, 128>}, {transform_indices = @transform_4, window_bounds = array<i64: 8, 1>}]} {
    %c0_i32 = arith.constant 0 : i32
    %0 = arith.cmpi eq, %arg1, %c0_i32 : i32
    %1 = arith.extui %0 : i1 to i32
    %cst = arith.constant -1.000000e+30 : f32
    %c0_i32_0 = arith.constant 0 : i32
    %2 = arith.cmpi ne, %1, %c0_i32_0 : i32
    scf.if %2 {
      %62 = vector.broadcast %cst : f32 to vector<8x1xf32>
      %c0_33 = arith.constant 0 : index
      %c0_34 = arith.constant 0 : index
      %63 = vector.load %arg7[%c0_33, %c0_34] : memref<8x1xf32, #tpu.memory_space<vmem>>, vector<8x1xf32>
      tpu.vector_store %arg7[%c0_33, %c0_34], %62 {strides = array<i32>} : memref<8x1xf32, #tpu.memory_space<vmem>>, vector<8x1xf32>,
      %cst_35 = arith.constant 0.000000e+00 : f32
      %64 = vector.broadcast %cst_35 : f32 to vector<8x1xf32>
      %c0_36 = arith.constant 0 : index
      %c0_37 = arith.constant 0 : index
      %65 = vector.load %arg8[%c0_36, %c0_37] : memref<8x1xf32, #tpu.memory_space<vmem>>, vector<8x1xf32>
      tpu.vector_store %arg8[%c0_36, %c0_37], %64 {strides = array<i32>} : memref<8x1xf32, #tpu.memory_space<vmem>>, vector<8x1xf32>,
      %cst_38 = arith.constant 0.000000e+00 : f32
      %66 = vector.broadcast %cst_38 : f32 to vector<8x1xf32>
      %c0_39 = arith.constant 0 : index
      %c0_40 = arith.constant 0 : index
      %67 = vector.load %arg9[%c0_39, %c0_40] : memref<8x1xf32, #tpu.memory_space<vmem>>, vector<8x1xf32>
      tpu.vector_store %arg9[%c0_39, %c0_40], %66 {strides = array<i32>} : memref<8x1xf32, #tpu.memory_space<vmem>>, vector<8x1xf32>,
      %cst_41 = arith.constant 0.000000e+00 : f32
      %68 = vector.broadcast %cst_41 : f32 to vector<8x1xf32>
      %c0_42 = arith.constant 0 : index
      %c0_43 = arith.constant 0 : index
      %69 = vector.load %arg10[%c0_42, %c0_43] : memref<8x1xf32, #tpu.memory_space<vmem>>, vector<8x1xf32>
      tpu.vector_store %arg10[%c0_42, %c0_43], %68 {strides = array<i32>} : memref<8x1xf32, #tpu.memory_space<vmem>>, vector<8x1xf32>,
    } else {
    }
    %c0 = arith.constant 0 : index
    %c0_1 = arith.constant 0 : index
    %3 = vector.load %arg4[%c0, %c0_1] : memref<8x128xf32, #tpu.memory_space<vmem>>, vector<8x128xf32>
    %c0_2 = arith.constant 0 : index
    %c0_3 = arith.constant 0 : index
    %4 = vector.load %arg5[%c0_2, %c0_3] : memref<128x128xf32, #tpu.memory_space<vmem>>, vector<128x128xf32>
    %cst_4 = arith.constant dense<0.000000e+00> : vector<8x128xf32>
    %5 = tpu.matmul %3, %4, %cst_4 {dimension_numbers = #tpu.dot_dimension_numbers<[1], [1], [0], [0], [0, 0, 1, 0], [], []>} : vector<8x128xf32>, vector<128x128xf32>, vector<8x128xf32> -> vector<8x128xf32>
    %c8_i32 = arith.constant 8 : i32
    %6 = arith.muli %arg0, %c8_i32 : i32
    %7 = tpu.iota {dimensions = array<i32: 0>} : vector<8x1xi32>
    %8 = vector.broadcast %6 : i32 to vector<8x1xi32>
    %9 = arith.addi %8, %7 : vector<8x1xi32>
    %c128_i32 = arith.constant 128 : i32
    %10 = arith.muli %arg1, %c128_i32 : i32
    %11 = tpu.iota {dimensions = array<i32: 1>} : vector<1x128xi32>
    %12 = vector.broadcast %10 : i32 to vector<1x128xi32>
    %13 = arith.addi %12, %11 : vector<1x128xi32>
    %14 = vector.broadcast %9 : vector<8x1xi32> to vector<8x128xi32>
    %15 = vector.broadcast %13 : vector<1x128xi32> to vector<8x128xi32>
    %16 = arith.cmpi ne, %14, %15 : vector<8x128xi32>
    %c16_i32 = arith.constant 16 : i32
    %17 = vector.broadcast %c16_i32 : i32 to vector<1x128xi32>
    %18 = arith.cmpi slt, %13, %17 : vector<1x128xi32>
    %19 = vector.broadcast %18 : vector<1x128xi1> to vector<8x128xi1>
    %20 = arith.andi %16, %19 : vector<8x128xi1>
    %cst_5 = arith.constant -1.000000e+30 : f32
    %21 = vector.broadcast %cst_5 : f32 to vector<8x128xf32>
    %22 = arith.select %20, %5, %21 : vector<8x128xi1>, vector<8x128xf32>
    %c0_6 = arith.constant 0 : index
    %c0_7 = arith.constant 0 : index
    %23 = vector.load %arg7[%c0_6, %c0_7] : memref<8x1xf32, #tpu.memory_space<vmem>>, vector<8x1xf32>
    %cst_8 = arith.constant dense<0xFF800000> : vector<8xf32>
    %24 = vector.multi_reduction <maximumf>, %22, %cst_8 [1] : vector<8x128xf32> to vector<8xf32>
    %25 = vector.shape_cast %24 : vector<8xf32> to vector<8x1xf32>
    %26 = arith.maximumf %23, %25 : vector<8x1xf32>
    %27 = arith.subf %23, %26 : vector<8x1xf32>
    %28 = math.exp %27 : vector<8x1xf32>
    %29 = vector.broadcast %26 : vector<8x1xf32> to vector<8x128xf32>
    %30 = arith.subf %22, %29 : vector<8x128xf32>
    %31 = math.exp %30 : vector<8x128xf32>
    %c0_9 = arith.constant 0 : index
    %c0_10 = arith.constant 0 : index
    %32 = vector.load %arg8[%c0_9, %c0_10] : memref<8x1xf32, #tpu.memory_space<vmem>>, vector<8x1xf32>
    %33 = arith.mulf %28, %32 : vector<8x1xf32>
    %cst_11 = arith.constant dense<0.000000e+00> : vector<8xf32>
    %34 = vector.multi_reduction <add>, %31, %cst_11 [1] : vector<8x128xf32> to vector<8xf32>
    %35 = vector.shape_cast %34 : vector<8xf32> to vector<8x1xf32>
    %36 = arith.addf %33, %35 : vector<8x1xf32>
    %c0_12 = arith.constant 0 : index
    %c0_13 = arith.constant 0 : index
    %37 = vector.load %arg8[%c0_12, %c0_13] : memref<8x1xf32, #tpu.memory_space<vmem>>, vector<8x1xf32>
    tpu.vector_store %arg8[%c0_12, %c0_13], %36 {strides = array<i32>} : memref<8x1xf32, #tpu.memory_space<vmem>>, vector<8x1xf32>,
    %c0_14 = arith.constant 0 : index
    %c0_15 = arith.constant 0 : index
    %38 = vector.load %arg7[%c0_14, %c0_15] : memref<8x1xf32, #tpu.memory_space<vmem>>, vector<8x1xf32>
    tpu.vector_store %arg7[%c0_14, %c0_15], %26 {strides = array<i32>} : memref<8x1xf32, #tpu.memory_space<vmem>>, vector<8x1xf32>,
    %c0_16 = arith.constant 0 : index
    %c0_17 = arith.constant 0 : index
    %39 = vector.load %arg2[%c0_16, %c0_17] : memref<8x1xi32, #tpu.memory_space<vmem>>, vector<8x1xi32>
    %c0_18 = arith.constant 0 : index
    %c0_19 = arith.constant 0 : index
    %40 = vector.load %arg3[%c0_18, %c0_19] : memref<1x128xi32, #tpu.memory_space<vmem>>, vector<1x128xi32>
    %41 = vector.broadcast %39 : vector<8x1xi32> to vector<8x128xi32>
    %42 = vector.broadcast %40 : vector<1x128xi32> to vector<8x128xi32>
    %43 = arith.cmpi eq, %41, %42 : vector<8x128xi32>
    %44 = arith.andi %43, %20 : vector<8x128xi1>
    %c0_20 = arith.constant 0 : index
    %c0_21 = arith.constant 0 : index
    %45 = vector.load %arg9[%c0_20, %c0_21] : memref<8x1xf32, #tpu.memory_space<vmem>>, vector<8x1xf32>
    %cst_22 = arith.constant 0.000000e+00 : f32
    %46 = vector.broadcast %cst_22 : f32 to vector<8x128xf32>
    %47 = arith.select %44, %5, %46 : vector<8x128xi1>, vector<8x128xf32>
    %cst_23 = arith.constant dense<0.000000e+00> : vector<8xf32>
    %48 = vector.multi_reduction <add>, %47, %cst_23 [1] : vector<8x128xf32> to vector<8xf32>
    %49 = vector.shape_cast %48 : vector<8xf32> to vector<8x1xf32>
    %50 = arith.addf %45, %49 : vector<8x1xf32>
    %c0_24 = arith.constant 0 : index
    %c0_25 = arith.constant 0 : index
    %51 = vector.load %arg9[%c0_24, %c0_25] : memref<8x1xf32, #tpu.memory_space<vmem>>, vector<8x1xf32>
    tpu.vector_store %arg9[%c0_24, %c0_25], %50 {strides = array<i32>} : memref<8x1xf32, #tpu.memory_space<vmem>>, vector<8x1xf32>,
    %c0_26 = arith.constant 0 : index
    %c0_27 = arith.constant 0 : index
    %52 = vector.load %arg10[%c0_26, %c0_27] : memref<8x1xf32, #tpu.memory_space<vmem>>, vector<8x1xf32>
    %53 = arith.extui %44 : vector<8x128xi1> to vector<8x128xi32>
    %54 = arith.sitofp %53 : vector<8x128xi32> to vector<8x128xf32>
    %cst_28 = arith.constant dense<0.000000e+00> : vector<8xf32>
    %55 = vector.multi_reduction <add>, %54, %cst_28 [1] : vector<8x128xf32> to vector<8xf32>
    %56 = vector.shape_cast %55 : vector<8xf32> to vector<8x1xf32>
    %57 = arith.addf %52, %56 : vector<8x1xf32>
    %c0_29 = arith.constant 0 : index
    %c0_30 = arith.constant 0 : index
    %58 = vector.load %arg10[%c0_29, %c0_30] : memref<8x1xf32, #tpu.memory_space<vmem>>, vector<8x1xf32>
    tpu.vector_store %arg10[%c0_29, %c0_30], %57 {strides = array<i32>} : memref<8x1xf32, #tpu.memory_space<vmem>>, vector<8x1xf32>,
    %c0_i32_31 = arith.constant 0 : i32
    %59 = arith.cmpi eq, %arg1, %c0_i32_31 : i32
    %60 = arith.extui %59 : i1 to i32
    %c0_i32_32 = arith.constant 0 : i32
    %61 = arith.cmpi ne, %60, %c0_i32_32 : i32
    scf.if %61 {
      %c0_33 = arith.constant 0 : index
      %c0_34 = arith.constant 0 : index
      %62 = vector.load %arg10[%c0_33, %c0_34] : memref<8x1xf32, #tpu.memory_space<vmem>>, vector<8x1xf32>
      %cst_35 = arith.constant 9.99999997E-7 : f32
      %63 = vector.broadcast %cst_35 : f32 to vector<8x1xf32>
      %64 = arith.cmpf olt, %62, %63 : vector<8x1xf32>
      %cst_36 = arith.constant 1.000000e+00 : f32
      %65 = vector.broadcast %cst_36 : f32 to vector<8x1xf32>
      %66 = arith.select %64, %65, %62 : vector<8x1xi1>, vector<8x1xf32>
      %c0_37 = arith.constant 0 : index
      %c0_38 = arith.constant 0 : index
      %67 = vector.load %arg7[%c0_37, %c0_38] : memref<8x1xf32, #tpu.memory_space<vmem>>, vector<8x1xf32>
      %c0_39 = arith.constant 0 : index
      %c0_40 = arith.constant 0 : index
      %68 = vector.load %arg8[%c0_39, %c0_40] : memref<8x1xf32, #tpu.memory_space<vmem>>, vector<8x1xf32>
      %69 = math.log %68 : vector<8x1xf32>
      %70 = arith.addf %67, %69 : vector<8x1xf32>
      %c0_41 = arith.constant 0 : index
      %c0_42 = arith.constant 0 : index
      %71 = vector.load %arg9[%c0_41, %c0_42] : memref<8x1xf32, #tpu.memory_space<vmem>>, vector<8x1xf32>
      %72 = arith.mulf %62, %70 : vector<8x1xf32>
      %73 = arith.subf %71, %72 : vector<8x1xf32>
      %74 = tpu.reciprocal %66 : vector<8x1xf32> -> vector<8x1xf32>
      %75 = arith.mulf %73, %74 : vector<8x1xf32>
      %cst_43 = arith.constant -1.000000e+00 : f32
      %76 = vector.broadcast %cst_43 : f32 to vector<8x1xf32>
      %77 = arith.mulf %76, %75 : vector<8x1xf32>
      %c0_44 = arith.constant 0 : index
      %c0_45 = arith.constant 0 : index
      %78 = vector.load %arg6[%c0_44, %c0_45] : memref<8x1xf32, #tpu.memory_space<vmem>>, vector<8x1xf32>
      tpu.vector_store %arg6[%c0_44, %c0_45], %77 {strides = array<i32>} : memref<8x1xf32, #tpu.memory_space<vmem>>, vector<8x1xf32>,
    } else {
    }
    return
  }
  func.func @transform_0(%arg0: i32, %arg1: i32) -> (i32, i32) {
    %c0_i32 = arith.constant 0 : i32
    %c0_i32_0 = arith.constant 0 : i32
    return %arg0, %c0_i32 : i32, i32
  }
  func.func @transform_1(%arg0: i32, %arg1: i32) -> (i32, i32) {
    %c0_i32 = arith.constant 0 : i32
    %c0_i32_0 = arith.constant 0 : i32
    return %c0_i32, %arg1 : i32, i32
  }
  func.func @transform_2(%arg0: i32, %arg1: i32) -> (i32, i32) {
    %c0_i32 = arith.constant 0 : i32
    %c0_i32_0 = arith.constant 0 : i32
    return %arg0, %c0_i32 : i32, i32
  }
  func.func @transform_3(%arg0: i32, %arg1: i32) -> (i32, i32) {
    %c0_i32 = arith.constant 0 : i32
    %c0_i32_0 = arith.constant 0 : i32
    return %arg1, %c0_i32 : i32, i32
  }
  func.func @transform_4(%arg0: i32, %arg1: i32) -> (i32, i32) {
    %c0_i32 = arith.constant 0 : i32
    %c0_i32_0 = arith.constant 0 : i32
    return %arg0, %c0_i32 : i32, i32
  }
}

</mosaic_0001>

<llo_original>
// kernel: tpu_custom_call.1
$region0: #{tpu_custom_call.1}
  #allocation0 [shape = 'u32[]', space=smem, size = 0x4, offset = 0x4, fixed_abs, tag = 'smem constant byte address 0x4 - core index']
  #allocation1 [shape = 'u32[144,128]{1,0:T(1,128)}', space=vmem, size = 0x12000, scoped, tag = 'internal scratch']
  #allocation2 [shape = 'f32[8,1]{1,0:T(8,128)}', space=vmem, size = 0x1000, scoped, tag = 'scratch operand']
  #allocation3 [shape = 'f32[8,1]{1,0:T(8,128)}', space=vmem, size = 0x1000, scoped, tag = 'scratch operand']
  #allocation4 [shape = 'f32[8,1]{1,0:T(8,128)}', space=vmem, size = 0x1000, scoped, tag = 'scratch operand']
  #allocation5 [shape = 'f32[8,1]{1,0:T(8,128)}', space=vmem, size = 0x1000, scoped, tag = 'scratch operand']
  %s0 = inlined_call_operand.vmem [shape: s32[16,1], index: 0, kind: input, shape index: {}]
  %s1 = inlined_call_operand.vmem [shape: s32[1,128], index: 1, kind: input, shape index: {}]
  %s2 = inlined_call_operand.vmem [shape: f32[16,128], index: 2, kind: input, shape index: {}]
  %s3 = inlined_call_operand.hbm [shape: f32[128,128], index: 3, kind: input, shape index: {}]
  %s4 = inlined_call_operand.vmem [shape: f32[16,1], index: 4, kind: output, shape index: {}]
  %s5 = sld [smem:[#allocation0]]
  $region61: #{tpu_custom_call.1} parent=0
    _
  %s7 = ssub.s32 1, %s5
  %s8 = scalar_select 0, %s7, %s5
  $region1: #{tpu_custom_call.1} parent=0
    #allocation6 [shape = 'u8[65536]{0}', space=vmem, size = 0x10000, scoped, tag = 'input window, operand 3, single buffered']
    #allocation7 [shape = 's32[2]{0}', space=sflag, size = 0x8, scoped, tag = 'scoped memory for tpu_custom_call.1']
    %9 = vsyncpa [#allocation7], 0
    loop: start=0, step=1, limit=4
    $region2: #{tpu_custom_call.1} parent=1 // loop_pre_header
      _
    $region3: #{tpu_custom_call.1} parent=1 // loop_header
      %s11 = sphi 0, %s15
      %p12 = scmp.ge.s32.totalorder %s11, 4
      %s18 = sphi 0, %s30
      %s19 = sphi 0, %s26
      %s20 = sphi 0, %s18
      %s21 = sphi 0, %s19
      %s22 = sphi 0, %s20
      %s23 = sphi 0, %s21
      %s33 = sphi 0, %s35
      %s36 = sphi 0, %s33
      %s37 = sphi 0, %s36
      %s53 = sphi 0, %s37
      %s59 = sphi 0, %s61
      %s62 = sphi 0, %s59
      %s63 = sphi 0, %s62
      %s79 = sphi 0, %s63
      %s85 = sphi 0, %s87
      %s88 = sphi 0, %s85
      %s89 = sphi 0, %s88
      %s105 = sphi 0, %s89
      %s111 = sphi 0, %s113
      %s114 = sphi 0, %s111
      %s115 = sphi 0, %s114
      %s131 = sphi 0, %s115
      %s137 = sphi 0, %s139
      %s140 = sphi 0, %s137
      %s141 = sphi 0, %s140
      %s157 = sphi 0, %s141
    $region4: #{tpu_custom_call.1} parent=1 // loop_header_branch
      %14 = sbr.rel (%p12) target = $region8
    $region5: #{tpu_custom_call.1} parent=1 // loop_body
      %s16 = ssub.s32 %s11, 1
      %s17 = ssub.s32 %s11, 2
      %s24 = sadd.s32 1, %s19
      %p25 = scmp.ge.s32.totalorder %s24, 1
      %s26 = scalar_select %p25, 0, %s24
      %s27 = sadd.s32 1, %s18
      %s28 = scalar_select %p25, %s27, %s18
      %p29 = scmp.ge.s32.totalorder %s28, 2
      %s30 = scalar_select %p29, 0, %s28
      %s31 = ssub.s32 %s18, %s30
      %p32 = scmp.eq.s32.totalorder %s31, 0
      %s34 = sadd.s32 %s33, 1
      %s35 = scalar_select %p32, %s33, %s34
      %p38 = pneg %p32
      %p39 = scmp.eq.s32.totalorder %s11, 1
      %p40 = por %p38, %p39
      %p41 = scmp.ne.s32.totalorder %s33, %s36
      %p42 = scmp.eq.s32.totalorder %s11, 0
      %p43 = por %p41, %p42
      %p44 = scmp.ne.s32.totalorder %s33, %s36
      %p45 = scmp.eq.s32.totalorder %s16, 1
      %p46 = por %p44, %p45
      %p47 = scmp.ne.s32.totalorder %s36, %s37
      %p48 = scmp.eq.s32.totalorder %s16, 0
      %p49 = por %p47, %p48
      %p50 = scmp.ne.s32.totalorder %s36, %s37
      %p51 = scmp.eq.s32.totalorder %s17, 1
      %p52 = por %p50, %p51
      %p54 = scmp.ne.s32.totalorder %s37, %s53
      %p55 = scmp.eq.s32.totalorder %s17, 0
      %p56 = por %p54, %p55
      %s57 = ssub.s32 %s19, %s26
      %p58 = scmp.eq.s32.totalorder %s57, 0
      %s60 = sadd.s32 %s59, 1
      %s61 = scalar_select %p58, %s59, %s60
      %p64 = pneg %p58
      %p65 = scmp.eq.s32.totalorder %s11, 1
      %p66 = por %p64, %p65
      %p67 = scmp.ne.s32.totalorder %s59, %s62
      %p68 = scmp.eq.s32.totalorder %s11, 0
      %p69 = por %p67, %p68
      %p70 = scmp.ne.s32.totalorder %s59, %s62
      %p71 = scmp.eq.s32.totalorder %s16, 1
      %p72 = por %p70, %p71
      %p73 = scmp.ne.s32.totalorder %s62, %s63
      %p74 = scmp.eq.s32.totalorder %s16, 0
      %p75 = por %p73, %p74
      %p76 = scmp.ne.s32.totalorder %s62, %s63
      %p77 = scmp.eq.s32.totalorder %s17, 1
      %p78 = por %p76, %p77
      %p80 = scmp.ne.s32.totalorder %s63, %s79
      %p81 = scmp.eq.s32.totalorder %s17, 0
      %p82 = por %p80, %p81
      %s83 = ssub.s32 %s18, %s30
      %p84 = scmp.eq.s32.totalorder %s83, 0
      %s86 = sadd.s32 %s85, 1
      %s87 = scalar_select %p84, %s85, %s86
      %p90 = pneg %p84
      %p91 = scmp.eq.s32.totalorder %s11, 1
      %p92 = por %p90, %p91
      %p93 = scmp.ne.s32.totalorder %s85, %s88
      %p94 = scmp.eq.s32.totalorder %s11, 0
      %p95 = por %p93, %p94
      %p96 = scmp.ne.s32.totalorder %s85, %s88
      %p97 = scmp.eq.s32.totalorder %s16, 1
      %p98 = por %p96, %p97
      %p99 = scmp.ne.s32.totalorder %s88, %s89
      %p100 = scmp.eq.s32.totalorder %s16, 0
      %p101 = por %p99, %p100
      %p102 = scmp.ne.s32.totalorder %s88, %s89
      %p103 = scmp.eq.s32.totalorder %s17, 1
      %p104 = por %p102, %p103
      %p106 = scmp.ne.s32.totalorder %s89, %s105
      %p107 = scmp.eq.s32.totalorder %s17, 0
      %p108 = por %p106, %p107
      %s109 = ssub.s32 %s19, %s26
      %p110 = scmp.eq.s32.totalorder %s109, 0
      %s112 = sadd.s32 %s111, 1
      %s113 = scalar_select %p110, %s111, %s112
      %p116 = pneg %p110
      %p117 = scmp.eq.s32.totalorder %s11, 1
      %p118 = por %p116, %p117
      %p119 = scmp.ne.s32.totalorder %s111, %s114
      %p120 = scmp.eq.s32.totalorder %s11, 0
      %p121 = por %p119, %p120
      %p122 = scmp.ne.s32.totalorder %s111, %s114
      %p123 = scmp.eq.s32.totalorder %s16, 1
      %p124 = por %p122, %p123
      %p125 = scmp.ne.s32.totalorder %s114, %s115
      %p126 = scmp.eq.s32.totalorder %s16, 0
      %p127 = por %p125, %p126
      %p128 = scmp.ne.s32.totalorder %s114, %s115
      %p129 = scmp.eq.s32.totalorder %s17, 1
      %p130 = por %p128, %p129
      %p132 = scmp.ne.s32.totalorder %s115, %s131
      %p133 = scmp.eq.s32.totalorder %s17, 0
      %p134 = por %p132, %p133
      %s135 = ssub.s32 %s18, %s30
      %p136 = scmp.eq.s32.totalorder %s135, 0
      %s138 = sadd.s32 %s137, 1
      %s139 = scalar_select %p136, %s137, %s138
      %p142 = pneg %p136
      %p143 = scmp.eq.s32.totalorder %s11, 1
      %p144 = por %p142, %p143
      %p145 = scmp.ne.s32.totalorder %s137, %s140
      %p146 = scmp.eq.s32.totalorder %s11, 0
      %p147 = por %p145, %p146
      %p148 = scmp.ne.s32.totalorder %s137, %s140
      %p149 = scmp.eq.s32.totalorder %s16, 1
      %p150 = por %p148, %p149
      %p151 = scmp.ne.s32.totalorder %s140, %s141
      %p152 = scmp.eq.s32.totalorder %s16, 0
      %p153 = por %p151, %p152
      %p154 = scmp.ne.s32.totalorder %s140, %s141
      %p155 = scmp.eq.s32.totalorder %s17, 1
      %p156 = por %p154, %p155
      %p158 = scmp.ne.s32.totalorder %s141, %s157
      %p159 = scmp.eq.s32.totalorder %s17, 0
      %p160 = por %p158, %p159
      %p161 = scmp.le.s32.totalorder 1, %s11
      %p162 = scmp.lt.s32.totalorder %s11, 3
      %p163 = pnand %p161, %p162
      %p164 = pneg %p163
      // Predicated region
      $region9: #{tpu_custom_call.1} parent=5 // pred_check
        _
      $region10: #{tpu_custom_call.1} parent=5 // pred_check_branch
        %166 = sbr.rel (%p163) target = $region12
      $region11: #{tpu_custom_call.1} parent=5 // pred_region
        %s167 = ssub.s32 %s11, 1
        // Predicated region
        $region13: #{tpu_custom_call.1} parent=11 // pred_check
          %p168 = pneg %p75
        $region14: #{tpu_custom_call.1} parent=11 // pred_check_branch
          %170 = sbr.rel (%p168) target = $region16
        $region15: #{tpu_custom_call.1} parent=11 // pred_region
          %p171 = scmp.lt.s32.totalorder %s21, 0
          %s172 = scalar_select %p171, %s21, 0
          %s173 = scalar_lea.vmem %s1, %s172
        $region16: #{tpu_custom_call.1} parent=11 // pred_fallthru
          _
        // Predicated region
        $region17: #{tpu_custom_call.1} parent=11 // pred_check
          %p174 = pneg %p127
        $region18: #{tpu_custom_call.1} parent=11 // pred_check_branch
          %176 = sbr.rel (%p174) target = $region20
        $region19: #{tpu_custom_call.1} parent=11 // pred_region
          %s177 = smul.u32 16, %s21
          %s179 = ssub.s32 2048, 2048
          %180 = vsyncadd [#allocation7], %s179
          %s181 = smul.addr %s177, 128
          %s182 = scalar_lea.hbm %s3, %s181
          %s183 = sshll.u32 [#allocation6], 4
          %s184 = int_to_ptr.vmem [resolvable:$true] %s183
          %189 = dma.hbm_to_vmem [thread:$0]  %s182, 2048, %s184, [#allocation7], 128, 128, 8
        $region20: #{tpu_custom_call.1} parent=11 // pred_fallthru
          _
      $region12: #{tpu_custom_call.1} parent=5 // pred_fallthru
        _
      %p190 = scmp.lt.s32.totalorder %s11, 2
      // Predicated region
      $region21: #{tpu_custom_call.1} parent=5 // pred_check
        %p191 = pneg %p190
      $region22: #{tpu_custom_call.1} parent=5 // pred_check_branch
        %193 = sbr.rel (%p191) target = $region24
      $region23: #{tpu_custom_call.1} parent=5 // pred_region
        // Predicated region
        $region25: #{tpu_custom_call.1} parent=23 // pred_check
          %p194 = pneg %p43
        $region26: #{tpu_custom_call.1} parent=23 // pred_check_branch
          %196 = sbr.rel (%p194) target = $region28
        $region27: #{tpu_custom_call.1} parent=23 // pred_region
          %p197 = scmp.lt.s32.totalorder %s18, 1
          %s198 = scalar_select %p197, %s18, 1
          %s199 = smul.addr %s198, 8
          %s200 = scalar_lea.vmem %s0, %s199
        $region28: #{tpu_custom_call.1} parent=23 // pred_fallthru
          _
        // Predicated region
        $region29: #{tpu_custom_call.1} parent=23 // pred_check
          %p201 = pneg %p95
        $region30: #{tpu_custom_call.1} parent=23 // pred_check_branch
          %203 = sbr.rel (%p201) target = $region32
        $region31: #{tpu_custom_call.1} parent=23 // pred_region
          %p204 = scmp.lt.s32.totalorder %s18, 1
          %s205 = scalar_select %p204, %s18, 1
          %s206 = smul.addr %s205, 8
          %s207 = scalar_lea.vmem %s2, %s206
        $region32: #{tpu_custom_call.1} parent=23 // pred_fallthru
          _
      $region24: #{tpu_custom_call.1} parent=5 // pred_fallthru
        _
      %p208 = scmp.le.s32.totalorder 1, %s11
      %p209 = scmp.lt.s32.totalorder %s11, 3
      %p210 = pnand %p208, %p209
      %p211 = pneg %p210
      // Predicated region
      $region33: #{tpu_custom_call.1} parent=5 // pred_check
        _
      $region34: #{tpu_custom_call.1} parent=5 // pred_check_branch
        %213 = sbr.rel (%p210) target = $region36
      $region35: #{tpu_custom_call.1} parent=5 // pred_region
        %s214 = ssub.s32 %s11, 1
        // Predicated region
        $region37: #{tpu_custom_call.1} parent=35 // pred_check
          %p215 = pneg %p127
        $region38: #{tpu_custom_call.1} parent=35 // pred_check_branch
          %217 = sbr.rel (%p215) target = $region40
        $region39: #{tpu_custom_call.1} parent=35 // pred_region
          %218 = dma.done [#allocation7], 2048
        $region40: #{tpu_custom_call.1} parent=35 // pred_fallthru
          _
        %p219 = scmp.lt.s32.totalorder %s20, 1
        %s220 = scalar_select %p219, %s20, 1
        %s221 = smul.addr %s220, 8
        %s222 = scalar_lea.vmem %s0, %s221
        %p223 = pneg %p49
        %p224 = pneg %p46
        %p225 = scmp.lt.s32.totalorder %s21, 0
        %s226 = scalar_select %p225, %s21, 0
        %s227 = scalar_lea.vmem %s1, %s226
        %p228 = pneg %p75
        %p229 = pneg %p72
        %p230 = scmp.lt.s32.totalorder %s20, 1
        %s231 = scalar_select %p230, %s20, 1
        %s232 = smul.addr %s231, 8
        %s233 = scalar_lea.vmem %s2, %s232
        %p234 = pneg %p101
        %p235 = pneg %p98
        %p236 = pneg %p127
        %p237 = pneg %p124
        %p238 = pneg %p153
        %p239 = pneg %p150
        %p240 = scmp.lt.s32.totalorder %s20, 1
        %s241 = scalar_select %p240, %s20, 1
        %s242 = smul.addr %s241, 8
        %s243 = scalar_lea.vmem %s4, %s242
        %p244 = scmp.lt.s32.totalorder %s20, 1
        %s245 = scalar_select %p244, %s20, 1
        %s246 = smul.addr %s245, 8
        %s247 = scalar_lea.vmem %s0, %s246
        %p248 = scmp.lt.s32.totalorder %s21, 0
        %s249 = scalar_select %p248, %s21, 0
        %s250 = scalar_lea.vmem %s1, %s249
        %p251 = scmp.lt.s32.totalorder %s20, 1
        %s252 = scalar_select %p251, %s20, 1
        %s253 = smul.addr %s252, 8
        %s254 = scalar_lea.vmem %s2, %s253
        %s255 = smul.u32 16, %s21
        %p256 = scmp.lt.s32.totalorder %s20, 1
        %s257 = scalar_select %p256, %s20, 1
        %s258 = smul.addr %s257, 8
        %s259 = scalar_lea.vmem %s4, %s258
        %p260 = scmp.eq.s32.totalorder %s21, 0
        // Predicated region
        $region41: #{tpu_custom_call.1} parent=35 // pred_check
          %p261 = pneg %p260
        $region42: #{tpu_custom_call.1} parent=35 // pred_check_branch
          %263 = sbr.rel (%p261) target = $region44
        $region43: #{tpu_custom_call.1} parent=35 // pred_region
          %vm264 = vcmask 7168
          %265 = vst.msk [vmem:[#allocation2] sm:$0xff] %vm264, -1e+30
          %266 = vst.msk [vmem:[#allocation3] sm:$0xff] %vm264, 0.0
          %267 = vst.msk [vmem:[#allocation4] sm:$0xff] %vm264, 0.0
          %268 = vst.msk [vmem:[#allocation5] sm:$0xff] %vm264, 0.0
        $region44: #{tpu_custom_call.1} parent=35 // pred_fallthru
          _
        %v269 = vld [vmem:[%s254] sm:$0xff]
        %v270 = vld [vmem:[#allocation6] sm:$0xff]
        %v271 = vld [vmem:[#allocation6 + $0x8] sm:$0xff]
        %v272 = vld [vmem:[#allocation6 + $0x10] sm:$0xff]
        %v273 = vld [vmem:[#allocation6 + $0x18] sm:$0xff]
        %v274 = vld [vmem:[#allocation6 + $0x20] sm:$0xff]
        %v275 = vld [vmem:[#allocation6 + $0x28] sm:$0xff]
        %v276 = vld [vmem:[#allocation6 + $0x30] sm:$0xff]
        %v277 = vld [vmem:[#allocation6 + $0x38] sm:$0xff]
        %v278 = vld [vmem:[#allocation6 + $0x40] sm:$0xff]
        %v279 = vld [vmem:[#allocation6 + $0x48] sm:$0xff]
        %v280 = vld [vmem:[#allocation6 + $0x50] sm:$0xff]
        %v281 = vld [vmem:[#allocation6 + $0x58] sm:$0xff]
        %v282 = vld [vmem:[#allocation6 + $0x60] sm:$0xff]
        %v283 = vld [vmem:[#allocation6 + $0x68] sm:$0xff]
        %v284 = vld [vmem:[#allocation6 + $0x70] sm:$0xff]
        %v285 = vld [vmem:[#allocation6 + $0x78] sm:$0xff]
        %286 = vmatprep.subr.mxu0 0.0
        %287 = vmatpush1.xpose.msra.mxu0 %v285
        %288 = vmatprep.subr.mxu0 0.0
        %289 = vmatpush1.xpose.msra.mxu0 %v284
        %290 = vmatprep.subr.mxu0 0.0
        %291 = vmatpush1.xpose.msra.mxu0 %v283
        %292 = vmatprep.subr.mxu0 0.0
        %293 = vmatpush1.xpose.msra.mxu0 %v282
        %294 = vmatprep.subr.mxu0 0.0
        %295 = vmatpush1.xpose.msra.mxu0 %v281
        %296 = vmatprep.subr.mxu0 0.0
        %297 = vmatpush1.xpose.msra.mxu0 %v280
        %298 = vmatprep.subr.mxu0 0.0
        %299 = vmatpush1.xpose.msra.mxu0 %v279
        %300 = vmatprep.subr.mxu0 0.0
        %301 = vmatpush1.xpose.msra.mxu0 %v278
        %302 = vmatprep.subr.mxu0 0.0
        %303 = vmatpush1.xpose.msra.mxu0 %v277
        %304 = vmatprep.subr.mxu0 0.0
        %305 = vmatpush1.xpose.msra.mxu0 %v276
        %306 = vmatprep.subr.mxu0 0.0
        %307 = vmatpush1.xpose.msra.mxu0 %v275
        %308 = vmatprep.subr.mxu0 0.0
        %309 = vmatpush1.xpose.msra.mxu0 %v274
        %310 = vmatprep.subr.mxu0 0.0
        %311 = vmatpush1.xpose.msra.mxu0 %v273
        %312 = vmatprep.subr.mxu0 0.0
        %313 = vmatpush1.xpose.msra.mxu0 %v272
        %314 = vmatprep.subr.mxu0 0.0
        %315 = vmatpush1.xpose.msra.mxu0 %v271
        %316 = vmatprep.subr.mxu0 0.0
        %317 = vmatpush1.xpose.msra.mxu0 %v270
        %318 = vmatprep.subr.mxu0 0.0
        %319 = vmatpush2.xpose.msra.mxu0 0.0
        %320 = vmatprep.subr.mxu0 0.0
        %321 = vmatpush2.xpose.msra.mxu0 0.0
        %322 = vmatprep.subr.mxu0 0.0
        %323 = vmatpush2.xpose.msra.mxu0 0.0
        %324 = vmatprep.subr.mxu0 0.0
        %325 = vmatpush2.xpose.msra.mxu0 0.0
        %326 = vmatprep.subr.mxu0 0.0
        %327 = vmatpush2.xpose.msra.mxu0 0.0
        %328 = vmatprep.subr.mxu0 0.0
        %329 = vmatpush2.xpose.msra.mxu0 0.0
        %330 = vmatprep.subr.mxu0 0.0
        %331 = vmatpush2.xpose.msra.mxu0 0.0
        %332 = vmatprep.subr.mxu0 0.0
        %333 = vmatpush2.xpose.msra.mxu0 0.0
        %334 = vmatprep.subr.mxu0 0.0
        %335 = vmatpush2.xpose.msra.mxu0 0.0
        %336 = vmatprep.subr.mxu0 0.0
        %337 = vmatpush2.xpose.msra.mxu0 0.0
        %338 = vmatprep.subr.mxu0 0.0
        %339 = vmatpush2.xpose.msra.mxu0 0.0
        %340 = vmatprep.subr.mxu0 0.0
        %341 = vmatpush2.xpose.msra.mxu0 0.0
        %342 = vmatprep.subr.mxu0 0.0
        %343 = vmatpush2.xpose.msra.mxu0 0.0
        %344 = vmatprep.subr.mxu0 0.0
        %345 = vmatpush2.xpose.msra.mxu0 0.0
        %346 = vmatprep.subr.mxu0 0.0
        %347 = vmatpush2.xpose.msra.mxu0 0.0
        %348 = vmatprep.subr.mxu0 0.0
        %349 = vmatpush2.xpose.msra.mxu0 0.0
        %350 = vmatprep.mubr.f32.mxu0 0.0
        %351 = vmatmul.mubr.f32.gmra.mxu0 %v269
        %v352 = vpop.f32.mrf.mxu0
        %v353 = vadd.f32 0.0, %v352
        %v354 = vpop.f32.mrf.mxu0
        %355 = vdwg.mxu0
        %s356 = smul.u32 %s20, 8
        %v357 = vlaneseq
        %v358 = vshrl.u32 %v357, 7
        %v359 = vstv %s356
        %v360 = vadd.s32 %v359, %v358
        %s361 = smul.u32 %s21, 128
        %v362 = vlaneseq
        %v363 = vand.u32 %v362, 127
        %v364 = vstv %s361
        %v365 = vadd.s32 %v364, %v363
        %vm366 = vcmp.ne.s32.totalorder %v360, %v365
        %vm367 = vcmp.lt.s32.totalorder %v365, 16
        %v368 = vsel %vm367, 1, 0
        %vm369 = vcmp.eq.s32.totalorder %v368, 1
        %vm370 = vmand %vm366, %vm369
        %v371 = vsel %vm370, %v353, -1e+30
        %v372 = vld [vmem:[#allocation2] sm:$0xff]
        %373 = vmax.xlane.f32.xlu0 %v371
        %v374 = vpop.xlane.xlu0 %373
        %v375 = vmax.f32 %v372, %v374
        %v376 = vsub.f32 %v372, %v375
        %v377 = vmul.f32 %v376, 1.442695
        %v378 = vpow.pop %v377
        %380 = vset.pattern.permute.xlu0 0
        %381 = vperm.xlu0 %380, %v375
        %v382 = vpop.permute.xlu0 %381
        %v384 = vsub.f32 %v371, %v382
        %v385 = vmul.f32 %v384, 1.442695
        %v386 = vpow.pop %v385
        %v387 = vld [vmem:[#allocation3] sm:$0xff]
        %v388 = vmul.f32 %v378, %v387
        %389 = vadd.xlane.f32.xlu0 %v386
        %v390 = vpop.xlane.xlu0 %389
        %v391 = vadd.f32 %v388, %v390
        %vm392 = vcmask 7168
        %393 = vst.msk [vmem:[#allocation3] sm:$0xff] %vm392, %v391
        %394 = vst.msk [vmem:[#allocation2] sm:$0xff] %vm392, %v375
        %v395 = vld [vmem:[%s247] sm:$0xff]
        %v396 = vld [vmem:[%s250] sm:$0x1]
        %397 = vset.pattern.permute.xlu0 0
        %398 = vperm.xlu0 %397, %v395
        %v399 = vpop.permute.xlu0 %398
        %v400 = vlaneseq
        %v401 = vshrl.u32 %v400, 7
        %v402 = vsub.s32 0, %v401
        %v403 = vrot.slane %v396, %v402
        %vm404 = vcmp.eq.s32.totalorder %v399, %v403
        %vm405 = vmand %vm404, %vm370
        %v406 = vld [vmem:[#allocation4] sm:$0xff]
        %v407 = vsel %vm405, %v353, 0.0
        %408 = vadd.xlane.f32.xlu0 %v407
        %v409 = vpop.xlane.xlu0 %408
        %v410 = vadd.f32 %v406, %v409
        %411 = vst.msk [vmem:[#allocation4] sm:$0xff] %vm392, %v410
        %v412 = vld [vmem:[#allocation5] sm:$0xff]
        %v413 = vsel %vm405, 1, 0
        %v414 = vcvt.s32.f32 %v413
        %415 = vadd.xlane.f32.xlu0 %v414
        %v416 = vpop.xlane.xlu0 %415
        %v417 = vadd.f32 %v412, %v416
        %418 = vst.msk [vmem:[#allocation5] sm:$0xff] %vm392, %v417
        // Predicated region
        $region45: #{tpu_custom_call.1} parent=35 // pred_check
          %p419 = pneg %p260
        $region46: #{tpu_custom_call.1} parent=35 // pred_check_branch
          %421 = sbr.rel (%p419) target = $region48
        $region47: #{tpu_custom_call.1} parent=35 // pred_region
          %v422 = vld [vmem:[#allocation5] sm:$0xff]
          %vm423 = vcmp.lt.f32.partialorder %v422, 1e-06
          %v424 = vsel %vm423, 1.0, %v422
          %v425 = vld [vmem:[#allocation2] sm:$0xff]
          %v426 = vld [vmem:[#allocation3] sm:$0xff]
          %v427 = vlog2.pop %v426
          %v428 = vmul.f32 %v427, 0.6931472
          %v429 = vadd.f32 %v425, %v428
          %v430 = vld [vmem:[#allocation4] sm:$0xff]
          %v431 = vmul.f32 %v422, %v429
          %v432 = vsub.f32 %v430, %v431
          %v433 = vrcp.pop %v424
          %v434 = vmul.f32 %v432, %v433
          %v435 = vmul.f32 %v434, -1.0
          %436 = vst.msk [vmem:[%s259] sm:$0xff] %vm392, %v435
        $region48: #{tpu_custom_call.1} parent=35 // pred_fallthru
          _
        %p437 = scmp.lt.s32.totalorder %s20, 1
        %s438 = scalar_select %p437, %s20, 1
        %s439 = smul.addr %s438, 8
        %s440 = scalar_lea.vmem %s4, %s439
        // Predicated region
        $region49: #{tpu_custom_call.1} parent=35 // pred_check
          %p441 = pneg %p150
        $region50: #{tpu_custom_call.1} parent=35 // pred_check_branch
          %443 = sbr.rel (%p441) target = $region52
        $region51: #{tpu_custom_call.1} parent=35 // pred_region
          _
        $region52: #{tpu_custom_call.1} parent=35 // pred_fallthru
          _
      $region36: #{tpu_custom_call.1} parent=5 // pred_fallthru
        _
      %p444 = scmp.le.s32.totalorder 2, %s11
      // Predicated region
      $region53: #{tpu_custom_call.1} parent=5 // pred_check
        %p445 = pneg %p444
      $region54: #{tpu_custom_call.1} parent=5 // pred_check_branch
        %447 = sbr.rel (%p445) target = $region56
      $region55: #{tpu_custom_call.1} parent=5 // pred_region
        %s448 = ssub.s32 %s11, 2
        // Predicated region
        $region57: #{tpu_custom_call.1} parent=55 // pred_check
          %p449 = pneg %p156
        $region58: #{tpu_custom_call.1} parent=55 // pred_check_branch
          %451 = sbr.rel (%p449) target = $region60
        $region59: #{tpu_custom_call.1} parent=55 // pred_region
          %p452 = scmp.lt.s32.totalorder %s22, 1
          %s453 = scalar_select %p452, %s22, 1
          %s454 = smul.addr %s453, 8
          %s455 = scalar_lea.vmem %s4, %s454
        $region60: #{tpu_custom_call.1} parent=55 // pred_fallthru
          _
      $region56: #{tpu_custom_call.1} parent=5 // pred_fallthru
        _
    $region6: #{tpu_custom_call.1} parent=1 // loop_footer
      %s15 = sadd.s32 1, %s11
    $region7: #{tpu_custom_call.1} parent=1 // loop_footer_branch
      %10 = sbr.rel target = $region3
    $region8: #{tpu_custom_call.1} parent=1 // loop_exit
      _
    %456 = vsyncpa [#allocation7], 1
    %s457 = scalar_lea.sflag [#allocation7], 1
    %458 = vsyncpa %s457, 1

</llo_original>
